<compile_context>
chip_gen: v6e
topology: v6e:2x2x1
jax: 0.10.0
libtpu: 0.0.40
codegen_flags: <defaults>
</compile_context>

<pallas_src>
import jax
import jax.numpy as jnp
from jax.experimental import pallas as pl
from jax.experimental.pallas import tpu as pltpu


def _mlp_kernel(x_ref, w0_ref, b0_ref, w1_ref, b1_ref, w2_ref, b2_ref, o_ref):
    # fc0 (+ folded bn1) + relu
    h = jnp.dot(x_ref[...], w0_ref[...], preferred_element_type=jnp.float32)
    h = jnp.maximum(h + b0_ref[...], 0.0)
    # (dropout: identity in eval)
    # fc1 + relu   (bn2 is folded forward into the fc2 weights)
    h = jnp.dot(h.astype(w1_ref.dtype), w1_ref[...],
                preferred_element_type=jnp.float32)
    h = jnp.maximum(h + b1_ref[...], 0.0)
    # fc2 (+ folded bn2) as VPU mul + lane reduction (w2 passed as (1, h1) row)
    o = jnp.sum(h * w2_ref[...], axis=-1, keepdims=True) + b2_ref[...]
    o_ref[...] = o.astype(o_ref.dtype)


def _fold_params(params, compute_dtype):
    """Fold BN affines into fc0 / fc2 and pre-transpose fc2 into a row."""
    w0, b0, s1, t1, w1, b1, s2, t2, w2, b2 = params
    w0f = (w0 * s1).astype(compute_dtype)          # (D, h0): bn1 folded backward
    b0f = (b0 * s1 + t1).astype(jnp.float32)       # (1, h0)
    w1c = w1.astype(compute_dtype)                 # (h0, h1)
    b1c = b1.astype(jnp.float32)                   # (1, h1)
    w2row = (s2 * w2.T).astype(jnp.float32)        # (1, h1): bn2 folded forward
    b2f = (t2 @ w2 + b2).astype(jnp.float32)       # (1, 1)
    return w0f, b0f, w1c, b1c, w2row, b2f


def classification_layer(x, params, *, tm=None, compute_dtype=jnp.float32):
    """x: (B, C, H, W) float32. Returns (B, 1) float32.

    tm: batch tile. Defaults to the full batch for B <= 256 (single grid
        step), else 256 (v6e/v7x MXU width). Use tm=128 on v5e.
    compute_dtype: dtype of x / w0 / w1 fed to the MXU (use jnp.bfloat16 on
        v6e/v7x to halve DMA bytes; accumulation stays f32).
    """
    B = x.shape[0]
    x2d = x.reshape(B, -1)                              # torch.flatten(x, 1)
    D = x2d.shape[1]

    w0f, b0f, w1c, b1c, w2row, b2f = _fold_params(params, compute_dtype)
    h0 = w0f.shape[1]
    h1 = w1c.shape[1]

    if tm is None:
        tm = B if B <= 256 else 256
    # Pad ragged batches to a multiple of the tile (padded rows sliced off).
    Bp = pl.cdiv(B, tm) * tm
    if Bp != B:
        x2d = jnp.pad(x2d, ((0, Bp - B), (0, 0)))
    x2d = x2d.astype(compute_dtype)

    grid = (Bp // tm,)
    full = lambda shape: pl.BlockSpec(shape, lambda i: (0, 0))

    # NOTE: for very large D (big flattened conv features) add a K-reduction
    # grid axis + f32 accumulator so the (tm, D) / (D, h0) tiles fit v7x's
    # 64 MiB VMEM; not needed at these sizes.
    out = pl.pallas_call(
        _mlp_kernel,
        out_shape=jax.ShapeDtypeStruct((Bp, 1), jnp.float32),
        grid_spec=pltpu.PrefetchScalarGridSpec(
            num_scalar_prefetch=0,
            grid=grid,
            in_specs=[
                pl.BlockSpec((tm, D), lambda i: (i, 0)),   # x tile
                full((D, h0)),                             # w0 (bn1 folded)
                full((1, h0)),                             # b0 (bn1 folded)
                full((h0, h1)),                            # w1
                full((1, h1)),                             # b1
                full((1, h1)),                             # w2 row (bn2 folded)
                full((1, 1)),                              # b2 (bn2 folded)
            ],
            out_specs=pl.BlockSpec((tm, 1), lambda i: (i, 0)),
        ),
        compiler_params=pltpu.CompilerParams(
            dimension_semantics=("parallel",)),
    )(x2d, w0f, b0f, w1c, b1c, w2row, b2f)

    return out[:B]


def init_params(key, in_dim, h0, h1, eps=1e-5):
    """Deterministic synthetic parameters matching the PyTorch module shapes."""
    ks = jax.random.split(key, 14)
    # Linear weights stored as (in, out) == PyTorch weight.T
    w0 = jax.random.normal(ks[0], (in_dim, h0), jnp.float32) * 0.02
    b0 = jax.random.normal(ks[1], (1, h0), jnp.float32) * 0.01
    w1 = jax.random.normal(ks[2], (h0, h1), jnp.float32) * 0.02
    b1 = jax.random.normal(ks[3], (1, h1), jnp.float32) * 0.01
    w2 = jax.random.normal(ks[4], (h1, 1), jnp.float32) * 0.02
    b2 = jax.random.normal(ks[5], (1, 1), jnp.float32) * 0.01

    # Non-trivial BatchNorm1d statistics (inference mode).
    gamma1 = 1.0 + 0.1 * jax.random.normal(ks[6], (1, h0), jnp.float32)
    beta1 = 0.05 * jax.random.normal(ks[7], (1, h0), jnp.float32)
    mean1 = 0.1 * jax.random.normal(ks[8], (1, h0), jnp.float32)
    var1 = 1.0 + 0.1 * jnp.abs(jax.random.normal(ks[9], (1, h0), jnp.float32))
    gamma2 = 1.0 + 0.1 * jax.random.normal(ks[10], (1, h1), jnp.float32)
    beta2 = 0.05 * jax.random.normal(ks[11], (1, h1), jnp.float32)
    mean2 = 0.1 * jax.random.normal(ks[12], (1, h1), jnp.float32)
    var2 = 1.0 + 0.1 * jnp.abs(jax.random.normal(ks[13], (1, h1), jnp.float32))

    bn1_scale = gamma1 / jnp.sqrt(var1 + eps)
    bn1_shift = beta1 - mean1 * bn1_scale
    bn2_scale = gamma2 / jnp.sqrt(var2 + eps)
    bn2_shift = beta2 - mean2 * bn2_scale

    return (w0, b0, bn1_scale, bn1_shift,
            w1, b1, bn2_scale, bn2_shift,
            w2, b2)


def reference(x, params):
    """Pure-JAX reference of the forward pass (eval mode), unfused."""
    w0, b0, s1, t1, w1, b1, s2, t2, w2, b2 = params
    h = x.reshape(x.shape[0], -1)
    h = h @ w0 + b0
    h = h * s1 + t1
    h = jnp.maximum(h, 0.0)
    h = h @ w1 + b1
    h = jnp.maximum(h, 0.0)
    h = h * s2 + t2
    return h @ w2 + b2


if __name__ == "__main__":
    key = jax.random.PRNGKey(0)
    kx, kp = jax.random.split(key)

    # Small shapes: x (B=8, C=4, H=8, W=8) -> in_dim = 256, h0 = h1 = 128.
    B, C, H, W = 8, 4, 8, 8
    in_dim, h0, h1 = C * H * W, 128, 128

    x = jax.random.normal(kx, (B, C, H, W), jnp.float32)
    params = init_params(kp, in_dim, h0, h1)

    out = classification_layer(x, params)      # tm defaults to B -> grid=(1,)
    out = jax.block_until_ready(out)

    ref = reference(x, params)
    assert out.shape == (B, 1)
    assert jnp.allclose(out, ref, atol=1e-4, rtol=1e-4), "mismatch vs reference"

    print("KERNEL_OK")
</pallas_src>

<mosaic_0001>
module attributes {stable_mosaic.version = 11 : i64} {
  func.func @_mlp_kernel(%arg0: i32, %arg1: memref<8x256xf32, #tpu.memory_space<vmem>>, %arg2: memref<256x128xf32, #tpu.memory_space<vmem>>, %arg3: memref<1x128xf32, #tpu.memory_space<vmem>>, %arg4: memref<128x128xf32, #tpu.memory_space<vmem>>, %arg5: memref<1x128xf32, #tpu.memory_space<vmem>>, %arg6: memref<1x128xf32, #tpu.memory_space<vmem>>, %arg7: memref<1x1xf32, #tpu.memory_space<vmem>>, %arg8: memref<8x1xf32, #tpu.memory_space<vmem>>) attributes {dimension_semantics = [#tpu.dimension_semantics<parallel>], iteration_bounds = array<i64: 1>, scalar_prefetch = 0 : i64, scratch_operands = 0 : i64, tpu.core_type = #tpu.core_type<tc>, window_params = [{transform_indices = @transform_0, window_bounds = array<i64: 8, 256>}, {pipeline_mode = #tpu.pipeline_mode<synchronous>, transform_indices = @transform_1, window_bounds = array<i64: 256, 128>}, {pipeline_mode = #tpu.pipeline_mode<synchronous>, transform_indices = @transform_2, window_bounds = array<i64: 1, 128>}, {pipeline_mode = #tpu.pipeline_mode<synchronous>, transform_indices = @transform_3, window_bounds = array<i64: 128, 128>}, {pipeline_mode = #tpu.pipeline_mode<synchronous>, transform_indices = @transform_4, window_bounds = array<i64: 1, 128>}, {pipeline_mode = #tpu.pipeline_mode<synchronous>, transform_indices = @transform_5, window_bounds = array<i64: 1, 128>}, {pipeline_mode = #tpu.pipeline_mode<synchronous>, transform_indices = @transform_6, window_bounds = array<i64: 1, 1>}, {transform_indices = @transform_7, window_bounds = array<i64: 8, 1>}]} {
    %c0 = arith.constant 0 : index
    %c0_0 = arith.constant 0 : index
    %0 = vector.load %arg1[%c0, %c0_0] : memref<8x256xf32, #tpu.memory_space<vmem>>, vector<8x256xf32>
    %c0_1 = arith.constant 0 : index
    %c0_2 = arith.constant 0 : index
    %1 = vector.load %arg2[%c0_1, %c0_2] : memref<256x128xf32, #tpu.memory_space<vmem>>, vector<256x128xf32>
    %cst = arith.constant dense<0.000000e+00> : vector<8x128xf32>
    %2 = tpu.matmul %0, %1, %cst {dimension_numbers = #tpu.dot_dimension_numbers<[1], [0], [0], [1], [0, 0, 1, 1], [], []>} : vector<8x256xf32>, vector<256x128xf32>, vector<8x128xf32> -> vector<8x128xf32>
    %c0_3 = arith.constant 0 : index
    %c0_4 = arith.constant 0 : index
    %3 = vector.load %arg3[%c0_3, %c0_4] : memref<1x128xf32, #tpu.memory_space<vmem>>, vector<1x128xf32>
    %4 = vector.broadcast %3 : vector<1x128xf32> to vector<8x128xf32>
    %5 = arith.addf %2, %4 : vector<8x128xf32>
    %cst_5 = arith.constant 0.000000e+00 : f32
    %6 = vector.broadcast %cst_5 : f32 to vector<8x128xf32>
    %7 = arith.maximumf %5, %6 : vector<8x128xf32>
    %c0_6 = arith.constant 0 : index
    %c0_7 = arith.constant 0 : index
    %8 = vector.load %arg4[%c0_6, %c0_7] : memref<128x128xf32, #tpu.memory_space<vmem>>, vector<128x128xf32>
    %cst_8 = arith.constant dense<0.000000e+00> : vector<8x128xf32>
    %9 = tpu.matmul %7, %8, %cst_8 {dimension_numbers = #tpu.dot_dimension_numbers<[1], [0], [0], [1], [0, 0, 1, 1], [], []>} : vector<8x128xf32>, vector<128x128xf32>, vector<8x128xf32> -> vector<8x128xf32>
    %c0_9 = arith.constant 0 : index
    %c0_10 = arith.constant 0 : index
    %10 = vector.load %arg5[%c0_9, %c0_10] : memref<1x128xf32, #tpu.memory_space<vmem>>, vector<1x128xf32>
    %11 = vector.broadcast %10 : vector<1x128xf32> to vector<8x128xf32>
    %12 = arith.addf %9, %11 : vector<8x128xf32>
    %cst_11 = arith.constant 0.000000e+00 : f32
    %13 = vector.broadcast %cst_11 : f32 to vector<8x128xf32>
    %14 = arith.maximumf %12, %13 : vector<8x128xf32>
    %c0_12 = arith.constant 0 : index
    %c0_13 = arith.constant 0 : index
    %15 = vector.load %arg6[%c0_12, %c0_13] : memref<1x128xf32, #tpu.memory_space<vmem>>, vector<1x128xf32>
    %16 = vector.broadcast %15 : vector<1x128xf32> to vector<8x128xf32>
    %17 = arith.mulf %14, %16 : vector<8x128xf32>
    %cst_14 = arith.constant dense<0.000000e+00> : vector<8xf32>
    %18 = vector.multi_reduction <add>, %17, %cst_14 [1] : vector<8x128xf32> to vector<8xf32>
    %19 = vector.shape_cast %18 : vector<8xf32> to vector<8x1xf32>
    %c0_15 = arith.constant 0 : index
    %c0_16 = arith.constant 0 : index
    %20 = vector.load %arg7[%c0_15, %c0_16] : memref<1x1xf32, #tpu.memory_space<vmem>>, vector<1x1xf32>
    %21 = vector.broadcast %20 : vector<1x1xf32> to vector<8x1xf32>
    %22 = arith.addf %19, %21 : vector<8x1xf32>
    %c0_17 = arith.constant 0 : index
    %c0_18 = arith.constant 0 : index
    %23 = vector.load %arg8[%c0_17, %c0_18] : memref<8x1xf32, #tpu.memory_space<vmem>>, vector<8x1xf32>
    tpu.vector_store %arg8[%c0_17, %c0_18], %22 {strides = array<i32>} : memref<8x1xf32, #tpu.memory_space<vmem>>, vector<8x1xf32>,
    return
  }
  func.func @transform_0(%arg0: i32) -> (i32, i32) {
    %c0_i32 = arith.constant 0 : i32
    %c0_i32_0 = arith.constant 0 : i32
    return %arg0, %c0_i32 : i32, i32
  }
  func.func @transform_1(%arg0: i32) -> (i32, i32) {
    %c0_i32 = arith.constant 0 : i32
    %c0_i32_0 = arith.constant 0 : i32
    %c0_i32_1 = arith.constant 0 : i32
    return %c0_i32, %c0_i32_0 : i32, i32
  }
  func.func @transform_2(%arg0: i32) -> (i32, i32) {
    %c0_i32 = arith.constant 0 : i32
    %c0_i32_0 = arith.constant 0 : i32
    %c0_i32_1 = arith.constant 0 : i32
    return %c0_i32, %c0_i32_0 : i32, i32
  }
  func.func @transform_3(%arg0: i32) -> (i32, i32) {
    %c0_i32 = arith.constant 0 : i32
    %c0_i32_0 = arith.constant 0 : i32
    %c0_i32_1 = arith.constant 0 : i32
    return %c0_i32, %c0_i32_0 : i32, i32
  }
  func.func @transform_4(%arg0: i32) -> (i32, i32) {
    %c0_i32 = arith.constant 0 : i32
    %c0_i32_0 = arith.constant 0 : i32
    %c0_i32_1 = arith.constant 0 : i32
    return %c0_i32, %c0_i32_0 : i32, i32
  }
  func.func @transform_5(%arg0: i32) -> (i32, i32) {
    %c0_i32 = arith.constant 0 : i32
    %c0_i32_0 = arith.constant 0 : i32
    %c0_i32_1 = arith.constant 0 : i32
    return %c0_i32, %c0_i32_0 : i32, i32
  }
  func.func @transform_6(%arg0: i32) -> (i32, i32) {
    %c0_i32 = arith.constant 0 : i32
    %c0_i32_0 = arith.constant 0 : i32
    %c0_i32_1 = arith.constant 0 : i32
    return %c0_i32, %c0_i32_0 : i32, i32
  }
  func.func @transform_7(%arg0: i32) -> (i32, i32) {
    %c0_i32 = arith.constant 0 : i32
    %c0_i32_0 = arith.constant 0 : i32
    return %arg0, %c0_i32 : i32, i32
  }
}

</mosaic_0001>

<llo_original>
// kernel: tpu_custom_call.1
$region0: #{tpu_custom_call.1}
  #allocation0 [shape = 'u32[]', space=smem, size = 0x4, offset = 0x4, fixed_abs, tag = 'smem constant byte address 0x4 - core index']
  #allocation1 [shape = 'u32[144,128]{1,0:T(1,128)}', space=vmem, size = 0x12000, scoped, tag = 'internal scratch']
  #allocation2 [shape = 'f32[1,1]{1,0:T(1,128)S(1)}', space=vmem, size = 0x200, scoped, tag = 'scoped memory for tpu_custom_call.1']
  %s0 = inlined_call_operand.hbm [shape: f32[8,256], index: 0, kind: input, shape index: {}]
  %s1 = inlined_call_operand.hbm [shape: f32[256,128], index: 1, kind: input, shape index: {}]
  %s2 = inlined_call_operand.vmem [shape: f32[1,128], index: 2, kind: input, shape index: {}]
  %s3 = inlined_call_operand.hbm [shape: f32[128,128], index: 3, kind: input, shape index: {}]
  %s4 = inlined_call_operand.vmem [shape: f32[1,128], index: 4, kind: input, shape index: {}]
  %s5 = inlined_call_operand.vmem [shape: f32[1,128], index: 5, kind: input, shape index: {}]
  %s6 = inlined_call_operand.<no memory space> [shape: f32[1,1], index: 6, kind: input, shape index: {}]
  %s7 = inlined_call_operand.vmem [shape: f32[8,1], index: 7, kind: output, shape index: {}]
  %s8 = sld [smem:[#allocation0]]
  $region50: #{tpu_custom_call.1} parent=0
    _
  %s10 = ssub.s32 1, %s8
  %s11 = scalar_select 0, %s10, %s8
  %v12 = vstv %s6
  %13 = vst [vmem:[#allocation2] sm:$0x1] %v12
  $region1: #{tpu_custom_call.1} parent=0
    #allocation3 [shape = 'u8[8192]{0}', space=vmem, size = 0x2000, scoped, tag = 'input window, operand 0, single buffered']
    #allocation4 [shape = 's32[1]{0}', space=sflag, size = 0x4, scoped, tag = 'scoped memory for tpu_custom_call.1']
    #allocation5 [shape = 'u8[131072]{0}', space=vmem, size = 0x20000, scoped, tag = 'input window, operand 1, single buffered']
    #allocation6 [shape = 's32[1]{0}', space=sflag, size = 0x4, scoped, tag = 'scoped memory for tpu_custom_call.1']
    #allocation7 [shape = 'u8[65536]{0}', space=vmem, size = 0x10000, scoped, tag = 'input window, operand 3, single buffered']
    %14 = vsyncpa [#allocation4], 0
    %15 = vsyncpa [#allocation6], 0
    // Predicated region
    $region2: #{tpu_custom_call.1} parent=1 // pred_check
      _
    $region3: #{tpu_custom_call.1} parent=1 // pred_check_branch
      %17 = sbr.rel (0) target = $region5
    $region4: #{tpu_custom_call.1} parent=1 // pred_region
      %s19 = ssub.s32 256, 256
      %20 = vsyncadd [#allocation4], %s19
      %s22 = sshll.u32 [#allocation3], 4
      %s23 = int_to_ptr.vmem [resolvable:$true] %s22
      %25 = dma.hbm_to_vmem [thread:$0]  %s0, 256, %s23, [#allocation4]
    $region5: #{tpu_custom_call.1} parent=1 // pred_fallthru
      _
    // Predicated region
    $region6: #{tpu_custom_call.1} parent=1 // pred_check
      _
    $region7: #{tpu_custom_call.1} parent=1 // pred_check_branch
      %27 = sbr.rel (0) target = $region9
    $region8: #{tpu_custom_call.1} parent=1 // pred_region
      %s29 = ssub.s32 4096, 4096
      %30 = vsyncadd [#allocation6], %s29
      %s31 = sshll.u32 [#allocation5], 4
      %s32 = int_to_ptr.vmem [resolvable:$true] %s31
      %37 = dma.hbm_to_vmem [thread:$0]  %s1, 4096, %s32, [#allocation6], 128, 128, 8
    $region9: #{tpu_custom_call.1} parent=1 // pred_fallthru
      _
    // Predicated region
    $region10: #{tpu_custom_call.1} parent=1 // pred_check
      _
    $region11: #{tpu_custom_call.1} parent=1 // pred_check_branch
      %39 = sbr.rel (0) target = $region13
    $region12: #{tpu_custom_call.1} parent=1 // pred_region
      _
    $region13: #{tpu_custom_call.1} parent=1 // pred_fallthru
      _
    // Predicated region
    $region14: #{tpu_custom_call.1} parent=1 // pred_check
      _
    $region15: #{tpu_custom_call.1} parent=1 // pred_check_branch
      %41 = sbr.rel (0) target = $region17
    $region16: #{tpu_custom_call.1} parent=1 // pred_region
      %s43 = ssub.s32 2048, 2048
      %44 = vsyncadd [#allocation6], %s43
      %s45 = sshll.u32 [#allocation7], 4
      %s46 = int_to_ptr.vmem [resolvable:$true] %s45
      %51 = dma.hbm_to_vmem [thread:$0]  %s3, 2048, %s46, [#allocation6], 128, 128, 8
    $region17: #{tpu_custom_call.1} parent=1 // pred_fallthru
      _
    // Predicated region
    $region18: #{tpu_custom_call.1} parent=1 // pred_check
      _
    $region19: #{tpu_custom_call.1} parent=1 // pred_check_branch
      %53 = sbr.rel (0) target = $region21
    $region20: #{tpu_custom_call.1} parent=1 // pred_region
      _
    $region21: #{tpu_custom_call.1} parent=1 // pred_fallthru
      _
    // Predicated region
    $region22: #{tpu_custom_call.1} parent=1 // pred_check
      _
    $region23: #{tpu_custom_call.1} parent=1 // pred_check_branch
      %55 = sbr.rel (0) target = $region25
    $region24: #{tpu_custom_call.1} parent=1 // pred_region
      _
    $region25: #{tpu_custom_call.1} parent=1 // pred_fallthru
      _
    // Predicated region
    $region26: #{tpu_custom_call.1} parent=1 // pred_check
      _
    $region27: #{tpu_custom_call.1} parent=1 // pred_check_branch
      %57 = sbr.rel (0) target = $region29
    $region28: #{tpu_custom_call.1} parent=1 // pred_region
      _
    $region29: #{tpu_custom_call.1} parent=1 // pred_fallthru
      _
    // Predicated region
    $region30: #{tpu_custom_call.1} parent=1 // pred_check
      _
    $region31: #{tpu_custom_call.1} parent=1 // pred_check_branch
      %59 = sbr.rel (0) target = $region33
    $region32: #{tpu_custom_call.1} parent=1 // pred_region
      %60 = dma.done [#allocation4], 256
    $region33: #{tpu_custom_call.1} parent=1 // pred_fallthru
      _
    // Predicated region
    $region34: #{tpu_custom_call.1} parent=1 // pred_check
      _
    $region35: #{tpu_custom_call.1} parent=1 // pred_check_branch
      %62 = sbr.rel (0) target = $region37
    $region36: #{tpu_custom_call.1} parent=1 // pred_region
      %63 = dma.done [#allocation6], 4096
    $region37: #{tpu_custom_call.1} parent=1 // pred_fallthru
      _
    // Predicated region
    $region38: #{tpu_custom_call.1} parent=1 // pred_check
      _
    $region39: #{tpu_custom_call.1} parent=1 // pred_check_branch
      %65 = sbr.rel (0) target = $region41
    $region40: #{tpu_custom_call.1} parent=1 // pred_region
      %66 = dma.done [#allocation6], 2048
    $region41: #{tpu_custom_call.1} parent=1 // pred_fallthru
      _
    %v67 = vld [vmem:[#allocation3] sm:$0xff]
    %v68 = vld [vmem:[#allocation3 + $0x8] sm:$0xff]
    %v69 = vld [vmem:[#allocation5] sm:$0xff]
    %v70 = vld [vmem:[#allocation5 + $0x8] sm:$0xff]
    %v71 = vld [vmem:[#allocation5 + $0x10] sm:$0xff]
    %v72 = vld [vmem:[#allocation5 + $0x18] sm:$0xff]
    %v73 = vld [vmem:[#allocation5 + $0x20] sm:$0xff]
    %v74 = vld [vmem:[#allocation5 + $0x28] sm:$0xff]
    %v75 = vld [vmem:[#allocation5 + $0x30] sm:$0xff]
    %v76 = vld [vmem:[#allocation5 + $0x38] sm:$0xff]
    %v77 = vld [vmem:[#allocation5 + $0x40] sm:$0xff]
    %v78 = vld [vmem:[#allocation5 + $0x48] sm:$0xff]
    %v79 = vld [vmem:[#allocation5 + $0x50] sm:$0xff]
    %v80 = vld [vmem:[#allocation5 + $0x58] sm:$0xff]
    %v81 = vld [vmem:[#allocation5 + $0x60] sm:$0xff]
    %v82 = vld [vmem:[#allocation5 + $0x68] sm:$0xff]
    %v83 = vld [vmem:[#allocation5 + $0x70] sm:$0xff]
    %v84 = vld [vmem:[#allocation5 + $0x78] sm:$0xff]
    %v85 = vld [vmem:[#allocation5 + $0x80] sm:$0xff]
    %v86 = vld [vmem:[#allocation5 + $0x88] sm:$0xff]
    %v87 = vld [vmem:[#allocation5 + $0x90] sm:$0xff]
    %v88 = vld [vmem:[#allocation5 + $0x98] sm:$0xff]
    %v89 = vld [vmem:[#allocation5 + $0xa0] sm:$0xff]
    %v90 = vld [vmem:[#allocation5 + $0xa8] sm:$0xff]
    %v91 = vld [vmem:[#allocation5 + $0xb0] sm:$0xff]
    %v92 = vld [vmem:[#allocation5 + $0xb8] sm:$0xff]
    %v93 = vld [vmem:[#allocation5 + $0xc0] sm:$0xff]
    %v94 = vld [vmem:[#allocation5 + $0xc8] sm:$0xff]
    %v95 = vld [vmem:[#allocation5 + $0xd0] sm:$0xff]
    %v96 = vld [vmem:[#allocation5 + $0xd8] sm:$0xff]
    %v97 = vld [vmem:[#allocation5 + $0xe0] sm:$0xff]
    %v98 = vld [vmem:[#allocation5 + $0xe8] sm:$0xff]
    %v99 = vld [vmem:[#allocation5 + $0xf0] sm:$0xff]
    %v100 = vld [vmem:[#allocation5 + $0xf8] sm:$0xff]
    %v101 = vld [vmem:[%s2] sm:$0x1]
    %v103 = vlaneseq
    %v104 = vshrl.u32 %v103, 7
    %v105 = vsub.s32 0, %v104
    %v106 = vrot.slane %v101, %v105
    %108 = vmatprep.subr.mxu0 0.0
    %109 = vmatpush1.msra.mxu0 %v84
    %110 = vmatprep.subr.mxu0 0.0
    %111 = vmatpush1.msra.mxu0 %v83
    %112 = vmatprep.subr.mxu0 0.0
    %113 = vmatpush1.msra.mxu0 %v82
    %114 = vmatprep.subr.mxu0 0.0
    %115 = vmatpush1.msra.mxu0 %v81
    %116 = vmatprep.subr.mxu0 0.0
    %117 = vmatpush1.msra.mxu0 %v80
    %118 = vmatprep.subr.mxu0 0.0
    %119 = vmatpush1.msra.mxu0 %v79
    %120 = vmatprep.subr.mxu0 0.0
    %121 = vmatpush1.msra.mxu0 %v78
    %122 = vmatprep.subr.mxu0 0.0
    %123 = vmatpush1.msra.mxu0 %v77
    %124 = vmatprep.subr.mxu0 0.0
    %125 = vmatpush1.msra.mxu0 %v76
    %126 = vmatprep.subr.mxu0 0.0
    %127 = vmatpush1.msra.mxu0 %v75
    %128 = vmatprep.subr.mxu0 0.0
    %129 = vmatpush1.msra.mxu0 %v74
    %130 = vmatprep.subr.mxu0 0.0
    %131 = vmatpush1.msra.mxu0 %v73
    %132 = vmatprep.subr.mxu0 0.0
    %133 = vmatpush1.msra.mxu0 %v72
    %134 = vmatprep.subr.mxu0 0.0
    %135 = vmatpush1.msra.mxu0 %v71
    %136 = vmatprep.subr.mxu0 0.0
    %137 = vmatpush1.msra.mxu0 %v70
    %138 = vmatprep.subr.mxu0 0.0
    %139 = vmatpush1.msra.mxu0 %v69
    %140 = vmatprep.subr.mxu0 0.0
    %141 = vmatpush2.msra.mxu0 %v100
    %142 = vmatprep.subr.mxu0 0.0
    %143 = vmatpush2.msra.mxu0 %v99
    %144 = vmatprep.subr.mxu0 0.0
    %145 = vmatpush2.msra.mxu0 %v98
    %146 = vmatprep.subr.mxu0 0.0
    %147 = vmatpush2.msra.mxu0 %v97
    %148 = vmatprep.subr.mxu0 0.0
    %149 = vmatpush2.msra.mxu0 %v96
    %150 = vmatprep.subr.mxu0 0.0
    %151 = vmatpush2.msra.mxu0 %v95
    %152 = vmatprep.subr.mxu0 0.0
    %153 = vmatpush2.msra.mxu0 %v94
    %154 = vmatprep.subr.mxu0 0.0
    %155 = vmatpush2.msra.mxu0 %v93
    %156 = vmatprep.subr.mxu0 0.0
    %157 = vmatpush2.msra.mxu0 %v92
    %158 = vmatprep.subr.mxu0 0.0
    %159 = vmatpush2.msra.mxu0 %v91
    %160 = vmatprep.subr.mxu0 0.0
    %161 = vmatpush2.msra.mxu0 %v90
    %162 = vmatprep.subr.mxu0 0.0
    %163 = vmatpush2.msra.mxu0 %v89
    %164 = vmatprep.subr.mxu0 0.0
    %165 = vmatpush2.msra.mxu0 %v88
    %166 = vmatprep.subr.mxu0 0.0
    %167 = vmatpush2.msra.mxu0 %v87
    %168 = vmatprep.subr.mxu0 0.0
    %169 = vmatpush2.msra.mxu0 %v86
    %170 = vmatprep.subr.mxu0 0.0
    %171 = vmatpush2.msra.mxu0 %v85
    %172 = vmatprep.mubr.f32.mxu0 %v68
    %173 = vmatmul.mubr.f32.gmra.mxu0 %v67
    %v174 = vpop.f32.mrf.mxu0
    %v175 = vadd.f32 %v106, %v174
    %v176 = vpop.f32.mrf.mxu0
    %177 = vdwg.mxu0
    %v178 = vmax.f32 %v175, 0.0
    %v179 = vld [vmem:[#allocation7] sm:$0xff]
    %v180 = vld [vmem:[#allocation7 + $0x8] sm:$0xff]
    %v181 = vld [vmem:[#allocation7 + $0x10] sm:$0xff]
    %v182 = vld [vmem:[#allocation7 + $0x18] sm:$0xff]
    %v183 = vld [vmem:[#allocation7 + $0x20] sm:$0xff]
    %v184 = vld [vmem:[#allocation7 + $0x28] sm:$0xff]
    %v185 = vld [vmem:[#allocation7 + $0x30] sm:$0xff]
    %v186 = vld [vmem:[#allocation7 + $0x38] sm:$0xff]
    %v187 = vld [vmem:[#allocation7 + $0x40] sm:$0xff]
    %v188 = vld [vmem:[#allocation7 + $0x48] sm:$0xff]
    %v189 = vld [vmem:[#allocation7 + $0x50] sm:$0xff]
    %v190 = vld [vmem:[#allocation7 + $0x58] sm:$0xff]
    %v191 = vld [vmem:[#allocation7 + $0x60] sm:$0xff]
    %v192 = vld [vmem:[#allocation7 + $0x68] sm:$0xff]
    %v193 = vld [vmem:[#allocation7 + $0x70] sm:$0xff]
    %v194 = vld [vmem:[#allocation7 + $0x78] sm:$0xff]
    %v195 = vld [vmem:[%s4] sm:$0x1]
    %v197 = vlaneseq
    %v198 = vshrl.u32 %v197, 7
    %v199 = vsub.s32 0, %v198
    %v200 = vrot.slane %v195, %v199
    %202 = vmatprep.subr.mxu0 0.0
    %203 = vmatpush1.msra.mxu0 %v194
    %204 = vmatprep.subr.mxu0 0.0
    %205 = vmatpush1.msra.mxu0 %v193
    %206 = vmatprep.subr.mxu0 0.0
    %207 = vmatpush1.msra.mxu0 %v192
    %208 = vmatprep.subr.mxu0 0.0
    %209 = vmatpush1.msra.mxu0 %v191
    %210 = vmatprep.subr.mxu0 0.0
    %211 = vmatpush1.msra.mxu0 %v190
    %212 = vmatprep.subr.mxu0 0.0
    %213 = vmatpush1.msra.mxu0 %v189
    %214 = vmatprep.subr.mxu0 0.0
    %215 = vmatpush1.msra.mxu0 %v188
    %216 = vmatprep.subr.mxu0 0.0
    %217 = vmatpush1.msra.mxu0 %v187
    %218 = vmatprep.subr.mxu0 0.0
    %219 = vmatpush1.msra.mxu0 %v186
    %220 = vmatprep.subr.mxu0 0.0
    %221 = vmatpush1.msra.mxu0 %v185
    %222 = vmatprep.subr.mxu0 0.0
    %223 = vmatpush1.msra.mxu0 %v184
    %224 = vmatprep.subr.mxu0 0.0
    %225 = vmatpush1.msra.mxu0 %v183
    %226 = vmatprep.subr.mxu0 0.0
    %227 = vmatpush1.msra.mxu0 %v182
    %228 = vmatprep.subr.mxu0 0.0
    %229 = vmatpush1.msra.mxu0 %v181
    %230 = vmatprep.subr.mxu0 0.0
    %231 = vmatpush1.msra.mxu0 %v180
    %232 = vmatprep.subr.mxu0 0.0
    %233 = vmatpush1.msra.mxu0 %v179
    %234 = vmatprep.subr.mxu0 0.0
    %235 = vmatpush2.msra.mxu0 0.0
    %236 = vmatprep.subr.mxu0 0.0
    %237 = vmatpush2.msra.mxu0 0.0
    %238 = vmatprep.subr.mxu0 0.0
    %239 = vmatpush2.msra.mxu0 0.0
    %240 = vmatprep.subr.mxu0 0.0
    %241 = vmatpush2.msra.mxu0 0.0
    %242 = vmatprep.subr.mxu0 0.0
    %243 = vmatpush2.msra.mxu0 0.0
    %244 = vmatprep.subr.mxu0 0.0
    %245 = vmatpush2.msra.mxu0 0.0
    %246 = vmatprep.subr.mxu0 0.0
    %247 = vmatpush2.msra.mxu0 0.0
    %248 = vmatprep.subr.mxu0 0.0
    %249 = vmatpush2.msra.mxu0 0.0
    %250 = vmatprep.subr.mxu0 0.0
    %251 = vmatpush2.msra.mxu0 0.0
    %252 = vmatprep.subr.mxu0 0.0
    %253 = vmatpush2.msra.mxu0 0.0
    %254 = vmatprep.subr.mxu0 0.0
    %255 = vmatpush2.msra.mxu0 0.0
    %256 = vmatprep.subr.mxu0 0.0
    %257 = vmatpush2.msra.mxu0 0.0
    %258 = vmatprep.subr.mxu0 0.0
    %259 = vmatpush2.msra.mxu0 0.0
    %260 = vmatprep.subr.mxu0 0.0
    %261 = vmatpush2.msra.mxu0 0.0
    %262 = vmatprep.subr.mxu0 0.0
    %263 = vmatpush2.msra.mxu0 0.0
    %264 = vmatprep.subr.mxu0 0.0
    %265 = vmatpush2.msra.mxu0 0.0
    %266 = vmatprep.mubr.f32.mxu0 0.0
    %267 = vmatmul.mubr.f32.gmra.mxu0 %v178
    %v268 = vpop.f32.mrf.mxu0
    %v269 = vadd.f32 %v200, %v268
    %v270 = vpop.f32.mrf.mxu0
    %271 = vdwg.mxu0
    %v272 = vmax.f32 %v269, 0.0
    %v273 = vld [vmem:[%s5] sm:$0x1]
    %v275 = vlaneseq
    %v276 = vshrl.u32 %v275, 7
    %v277 = vsub.s32 0, %v276
    %v278 = vrot.slane %v273, %v277
    %v280 = vmul.f32 %v272, %v278
    %281 = vadd.xlane.f32.xlu0 %v280
    %v282 = vpop.xlane.xlu0 %281
    %v283 = vld [vmem:[#allocation2] sm:$0x1]
    %v285 = vlaneseq
    %v286 = vshrl.u32 %v285, 7
    %v287 = vsub.s32 0, %v286
    %v288 = vrot.slane %v283, %v287
    %v290 = vadd.f32 %v282, %v288
    %vm291 = vcmask 7168
    %292 = vst.msk [vmem:[%s7] sm:$0xff] %vm291, %v290
    // Predicated region
    $region42: #{tpu_custom_call.1} parent=1 // pred_check
      _
    $region43: #{tpu_custom_call.1} parent=1 // pred_check_branch
      %294 = sbr.rel (0) target = $region45
    $region44: #{tpu_custom_call.1} parent=1 // pred_region
      _
    $region45: #{tpu_custom_call.1} parent=1 // pred_fallthru
      _
    // Predicated region
    $region46: #{tpu_custom_call.1} parent=1 // pred_check
      _
    $region47: #{tpu_custom_call.1} parent=1 // pred_check_branch
      %296 = sbr.rel (0) target = $region49
    $region48: #{tpu_custom_call.1} parent=1 // pred_region
      _
    $region49: #{tpu_custom_call.1} parent=1 // pred_fallthru
      _
    %297 = vsyncpa [#allocation4], 1
    %298 = vsyncpa [#allocation6], 1

</llo_original>
